<compile_context>
chip_gen: v6e
topology: v6e:2x2x1
jax: 0.10.0
libtpu: 0.0.40
codegen_flags: <defaults>
</compile_context>

<pallas_src>
import jax
import jax.numpy as jnp
from jax.experimental import pallas as pl
from jax.experimental.pallas import tpu as pltpu


def _resize_filters_kernel(w_ref, bias_ref, x_ref, o_ref):
    # w_ref:    (C_out, C_in)  1x1 conv weight with BN scale already folded in
    # bias_ref: (C_out, 1)     folded BN bias (beta - mean * scale)
    # x_ref:    (C_in, T)      one batch element, T spatial columns on the lane axis
    # o_ref:    (C_out, T)
    y = jnp.dot(w_ref[...], x_ref[...], preferred_element_type=jnp.float32)  # (C_out, T)
    y = y + bias_ref[...]                      # broadcast bias over lanes
    o_ref[...] = jnp.maximum(y, 0.0).astype(o_ref.dtype)


def resize_filters_forward(x_nchw, conv_w, bn_gamma, bn_beta, bn_mean, bn_var,
                           eps=1e-5, target_tile_cols=1024):
    """x_nchw: (N, C_in, H, W) float32. conv_w: (C_out, C_in, 1, 1).

    Matches PyTorch Conv2d(k=1, bias=False) -> BatchNorm2d(eval) -> ReLU.
    """
    N, C_in, H, W = x_nchw.shape
    C_out = conv_w.shape[0]
    hw = H * W

    # Fold BN (inference semantics) into the weight and a per-channel bias:
    #   y = scale * (W @ x) + bias  ==  (scale * W) @ x + bias
    scale = bn_gamma / jnp.sqrt(bn_var + eps)                  # (C_out,)
    bias = (bn_beta - bn_mean * scale).reshape(C_out, 1)       # (C_out, 1)
    w_mat = conv_w.reshape(C_out, C_in) * scale[:, None]       # (C_out, C_in)

    # Flatten spatial dims onto the lane axis; no transpose needed for NCHW.
    x_flat = x_nchw.reshape(N, C_in, hw)

    # Lane-dense tile: multiple of 128, up to target_tile_cols; pad HW if needed
    # so we are never forced down to a small divisor tile.
    tile_cols = min(target_tile_cols, pl.cdiv(hw, 128) * 128)
    hw_pad = pl.cdiv(hw, tile_cols) * tile_cols
    if hw_pad != hw:
        x_flat = jnp.pad(x_flat, ((0, 0), (0, 0), (0, hw_pad - hw)))

    grid = (N, hw_pad // tile_cols)

    cost = pl.CostEstimate(
        flops=2 * N * hw_pad * C_in * C_out,
        transcendentals=0,
        bytes_accessed=4 * (N * hw_pad * C_in + N * hw_pad * C_out
                            + C_in * C_out + C_out),
    )

    out_flat = pl.pallas_call(
        _resize_filters_kernel,
        out_shape=jax.ShapeDtypeStruct((N, C_out, hw_pad), x_nchw.dtype),
        grid_spec=pltpu.PrefetchScalarGridSpec(
            num_scalar_prefetch=0,
            grid=grid,
            in_specs=[
                # Weight and bias stay resident (constant index_map).
                pl.BlockSpec((C_out, C_in), lambda n, j: (0, 0)),
                pl.BlockSpec((C_out, 1), lambda n, j: (0, 0)),
                # One batch element, one spatial tile; leading dim squeezed.
                pl.BlockSpec((None, C_in, tile_cols), lambda n, j: (n, 0, j)),
            ],
            out_specs=pl.BlockSpec((None, C_out, tile_cols), lambda n, j: (n, 0, j)),
        ),
        compiler_params=pltpu.CompilerParams(
            # Both grid axes are fully independent -> shard across TCs on v7x.
            dimension_semantics=("parallel", "parallel"),
        ),
        cost_estimate=cost,
    )(w_mat, bias, x_flat)

    # Drop spatial padding (if any) and restore NCHW.
    out = out_flat[:, :, :hw].reshape(N, C_out, H, W)
    return out


def _reference_forward(x_nchw, conv_w, bn_gamma, bn_beta, bn_mean, bn_var, eps=1e-5):
    # Pure-JAX reference of conv1x1 -> BN(eval) -> ReLU for verification.
    C_out, C_in = conv_w.shape[0], conv_w.shape[1]
    y = jnp.einsum("nchw,oc->nohw", x_nchw, conv_w.reshape(C_out, C_in))
    scale = bn_gamma / jnp.sqrt(bn_var + eps)
    bias = bn_beta - bn_mean * scale
    y = y * scale[None, :, None, None] + bias[None, :, None, None]
    return jnp.maximum(y, 0.0)


if __name__ == "__main__":
    key = jax.random.PRNGKey(0)
    k_x, k_w, k_g, k_b, k_m, k_v = jax.random.split(key, 6)

    N, C_in, H, W = 2, 4, 16, 16
    C_out = 8

    x = jax.random.normal(k_x, (N, C_in, H, W), dtype=jnp.float32)
    conv_w = jax.random.normal(k_w, (C_out, C_in, 1, 1), dtype=jnp.float32) * 0.1
    bn_gamma = jax.random.uniform(k_g, (C_out,), dtype=jnp.float32, minval=0.5, maxval=1.5)
    bn_beta = jax.random.normal(k_b, (C_out,), dtype=jnp.float32) * 0.1
    bn_mean = jax.random.normal(k_m, (C_out,), dtype=jnp.float32) * 0.1
    bn_var = jax.random.uniform(k_v, (C_out,), dtype=jnp.float32, minval=0.5, maxval=1.5)

    out = resize_filters_forward(x, conv_w, bn_gamma, bn_beta, bn_mean, bn_var)
    out = jax.block_until_ready(out)

    ref = _reference_forward(x, conv_w, bn_gamma, bn_beta, bn_mean, bn_var)
    assert out.shape == (N, C_out, H, W)
    assert jnp.allclose(out, ref, atol=1e-5, rtol=1e-5)

    print("KERNEL_OK")
</pallas_src>

<mosaic_0001>
module attributes {stable_mosaic.version = 11 : i64} {
  func.func @_resize_filters_kernel(%arg0: i32, %arg1: i32, %arg2: memref<8x4xf32, #tpu.memory_space<vmem>>, %arg3: memref<8x1xf32, #tpu.memory_space<vmem>>, %arg4: memref<1x4x256xf32, #tpu.memory_space<vmem>>, %arg5: memref<1x8x256xf32, #tpu.memory_space<vmem>>) attributes {dimension_semantics = [#tpu.dimension_semantics<parallel>, #tpu.dimension_semantics<parallel>], iteration_bounds = array<i64: 2, 1>, scalar_prefetch = 0 : i64, scratch_operands = 0 : i64, tpu.core_type = #tpu.core_type<tc>, window_params = [{pipeline_mode = #tpu.pipeline_mode<synchronous>, transform_indices = @transform_0, window_bounds = array<i64: 8, 4>}, {pipeline_mode = #tpu.pipeline_mode<synchronous>, transform_indices = @transform_1, window_bounds = array<i64: 8, 1>}, {transform_indices = @transform_2, window_bounds = array<i64: 1, 4, 256>}, {transform_indices = @transform_3, window_bounds = array<i64: 1, 8, 256>}]} {
    %c0 = arith.constant 0 : index
    %c0_0 = arith.constant 0 : index
    %0 = vector.load %arg2[%c0, %c0_0] : memref<8x4xf32, #tpu.memory_space<vmem>>, vector<8x4xf32>
    %c0_1 = arith.constant 0 : index
    %c0_2 = arith.constant 0 : index
    %c0_3 = arith.constant 0 : index
    %1 = vector.load %arg4[%c0_1, %c0_2, %c0_3] : memref<1x4x256xf32, #tpu.memory_space<vmem>>, vector<1x4x256xf32>
    %2 = vector.shape_cast %1 : vector<1x4x256xf32> to vector<4x256xf32>
    %cst = arith.constant dense<0.000000e+00> : vector<8x256xf32>
    %3 = tpu.matmul %0, %2, %cst {dimension_numbers = #tpu.dot_dimension_numbers<[1], [0], [0], [1], [0, 0, 1, 1], [], []>} : vector<8x4xf32>, vector<4x256xf32>, vector<8x256xf32> -> vector<8x256xf32>
    %c0_4 = arith.constant 0 : index
    %c0_5 = arith.constant 0 : index
    %4 = vector.load %arg3[%c0_4, %c0_5] : memref<8x1xf32, #tpu.memory_space<vmem>>, vector<8x1xf32>
    %5 = vector.broadcast %4 : vector<8x1xf32> to vector<8x256xf32>
    %6 = arith.addf %3, %5 : vector<8x256xf32>
    %cst_6 = arith.constant 0.000000e+00 : f32
    %7 = vector.broadcast %cst_6 : f32 to vector<8x256xf32>
    %8 = arith.maximumf %6, %7 : vector<8x256xf32>
    %c0_7 = arith.constant 0 : index
    %c0_8 = arith.constant 0 : index
    %c0_9 = arith.constant 0 : index
    %9 = vector.load %arg5[%c0_7, %c0_8, %c0_9] : memref<1x8x256xf32, #tpu.memory_space<vmem>>, vector<1x8x256xf32>
    %10 = vector.shape_cast %9 : vector<1x8x256xf32> to vector<8x256xf32>
    %11 = vector.shape_cast %8 : vector<8x256xf32> to vector<1x8x256xf32>
    tpu.vector_store %arg5[%c0_7, %c0_8, %c0_9], %11 {strides = array<i32>} : memref<1x8x256xf32, #tpu.memory_space<vmem>>, vector<1x8x256xf32>,
    return
  }
  func.func @transform_0(%arg0: i32, %arg1: i32) -> (i32, i32) {
    %c0_i32 = arith.constant 0 : i32
    %c0_i32_0 = arith.constant 0 : i32
    %c0_i32_1 = arith.constant 0 : i32
    return %c0_i32, %c0_i32_0 : i32, i32
  }
  func.func @transform_1(%arg0: i32, %arg1: i32) -> (i32, i32) {
    %c0_i32 = arith.constant 0 : i32
    %c0_i32_0 = arith.constant 0 : i32
    %c0_i32_1 = arith.constant 0 : i32
    return %c0_i32, %c0_i32_0 : i32, i32
  }
  func.func @transform_2(%arg0: i32, %arg1: i32) -> (i32, i32, i32) {
    %c0_i32 = arith.constant 0 : i32
    %c0_i32_0 = arith.constant 0 : i32
    return %arg0, %c0_i32, %arg1 : i32, i32, i32
  }
  func.func @transform_3(%arg0: i32, %arg1: i32) -> (i32, i32, i32) {
    %c0_i32 = arith.constant 0 : i32
    %c0_i32_0 = arith.constant 0 : i32
    return %arg0, %c0_i32, %arg1 : i32, i32, i32
  }
}

</mosaic_0001>

<llo_original>
// kernel: tpu_custom_call.1
$region0: #{tpu_custom_call.1}
  #allocation0 [shape = 'u32[]', space=smem, size = 0x4, offset = 0x4, fixed_abs, tag = 'smem constant byte address 0x4 - core index']
  #allocation1 [shape = 'u32[144,128]{1,0:T(1,128)}', space=vmem, size = 0x12000, scoped, tag = 'internal scratch']
  %s0 = inlined_call_operand.vmem [shape: f32[8,4], index: 0, kind: input, shape index: {}]
  %s1 = inlined_call_operand.vmem [shape: f32[8,1], index: 1, kind: input, shape index: {}]
  %s2 = inlined_call_operand.vmem [shape: f32[2,4,256], index: 2, kind: input, shape index: {}]
  %s3 = inlined_call_operand.hbm [shape: f32[2,8,256], index: 3, kind: output, shape index: {}]
  %s4 = sld [smem:[#allocation0]]
  $region45: #{tpu_custom_call.1} parent=0
    _
  %s6 = ssub.s32 1, %s4
  %s7 = scalar_select 0, %s6, %s4
  $region1: #{tpu_custom_call.1} parent=0
    #allocation2 [shape = 'u8[16384]{0}', space=vmem, size = 0x4000, scoped, tag = 'output window, operand 0']
    #allocation3 [shape = 's32[2]{0}', space=sflag, size = 0x8, scoped, tag = 'scoped memory for tpu_custom_call.1']
    %8 = vsyncpa [#allocation3], 0
    %s9 = scalar_lea.sflag [#allocation3], 1
    %10 = vsyncpa %s9, 0
    loop: start=0, step=1, limit=4
    $region2: #{tpu_custom_call.1} parent=1 // loop_pre_header
      _
    $region3: #{tpu_custom_call.1} parent=1 // loop_header
      %s12 = sphi 0, %s16
      %p13 = scmp.ge.s32.totalorder %s12, 4
      %s19 = sphi 0, %s31
      %s20 = sphi 0, %s27
      %s21 = sphi 0, %s19
      %s22 = sphi 0, %s20
      %s23 = sphi 0, %s21
      %s24 = sphi 0, %s22
      %s32 = sphi 0, %s32
      %s34 = sphi 0, %s32
      %s35 = sphi 0, %s34
      %s49 = sphi 0, %s35
      %s53 = sphi 0, %s53
      %s55 = sphi 0, %s53
      %s56 = sphi 0, %s55
      %s70 = sphi 0, %s56
      %s78 = sphi 0, %s80
      %s81 = sphi 0, %s78
      %s82 = sphi 0, %s81
      %s98 = sphi 0, %s82
      %s106 = sphi 0, %s108
      %s109 = sphi 0, %s106
      %s110 = sphi 0, %s109
      %s126 = sphi 0, %s110
    $region4: #{tpu_custom_call.1} parent=1 // loop_header_branch
      %15 = sbr.rel (%p13) target = $region8
    $region5: #{tpu_custom_call.1} parent=1 // loop_body
      %s17 = ssub.s32 %s12, 1
      %s18 = ssub.s32 %s12, 2
      %s25 = sadd.s32 1, %s20
      %p26 = scmp.ge.s32.totalorder %s25, 1
      %s27 = scalar_select %p26, 0, %s25
      %s28 = sadd.s32 1, %s19
      %s29 = scalar_select %p26, %s28, %s19
      %p30 = scmp.ge.s32.totalorder %s29, 2
      %s31 = scalar_select %p30, 0, %s29
      %s33 = sadd.s32 %s32, 1
      %p36 = scmp.eq.s32.totalorder %s12, 1
      %p37 = scmp.ne.s32.totalorder %s32, %s34
      %p38 = scmp.eq.s32.totalorder %s12, 0
      %p39 = por %p37, %p38
      %p40 = scmp.ne.s32.totalorder %s32, %s34
      %p41 = scmp.eq.s32.totalorder %s17, 1
      %p42 = por %p40, %p41
      %p43 = scmp.ne.s32.totalorder %s34, %s35
      %p44 = scmp.eq.s32.totalorder %s17, 0
      %p45 = por %p43, %p44
      %p46 = scmp.ne.s32.totalorder %s34, %s35
      %p47 = scmp.eq.s32.totalorder %s18, 1
      %p48 = por %p46, %p47
      %p50 = scmp.ne.s32.totalorder %s35, %s49
      %p51 = scmp.eq.s32.totalorder %s18, 0
      %p52 = por %p50, %p51
      %s54 = sadd.s32 %s53, 1
      %p57 = scmp.eq.s32.totalorder %s12, 1
      %p58 = scmp.ne.s32.totalorder %s53, %s55
      %p59 = scmp.eq.s32.totalorder %s12, 0
      %p60 = por %p58, %p59
      %p61 = scmp.ne.s32.totalorder %s53, %s55
      %p62 = scmp.eq.s32.totalorder %s17, 1
      %p63 = por %p61, %p62
      %p64 = scmp.ne.s32.totalorder %s55, %s56
      %p65 = scmp.eq.s32.totalorder %s17, 0
      %p66 = por %p64, %p65
      %p67 = scmp.ne.s32.totalorder %s55, %s56
      %p68 = scmp.eq.s32.totalorder %s18, 1
      %p69 = por %p67, %p68
      %p71 = scmp.ne.s32.totalorder %s56, %s70
      %p72 = scmp.eq.s32.totalorder %s18, 0
      %p73 = por %p71, %p72
      %s74 = ssub.s32 %s19, %s31
      %s75 = ssub.s32 %s20, %s27
      %s76 = sor.u32 %s74, %s75
      %p77 = scmp.eq.s32.totalorder %s76, 0
      %s79 = sadd.s32 %s78, 1
      %s80 = scalar_select %p77, %s78, %s79
      %p83 = pneg %p77
      %p84 = scmp.eq.s32.totalorder %s12, 1
      %p85 = por %p83, %p84
      %p86 = scmp.ne.s32.totalorder %s78, %s81
      %p87 = scmp.eq.s32.totalorder %s12, 0
      %p88 = por %p86, %p87
      %p89 = scmp.ne.s32.totalorder %s78, %s81
      %p90 = scmp.eq.s32.totalorder %s17, 1
      %p91 = por %p89, %p90
      %p92 = scmp.ne.s32.totalorder %s81, %s82
      %p93 = scmp.eq.s32.totalorder %s17, 0
      %p94 = por %p92, %p93
      %p95 = scmp.ne.s32.totalorder %s81, %s82
      %p96 = scmp.eq.s32.totalorder %s18, 1
      %p97 = por %p95, %p96
      %p99 = scmp.ne.s32.totalorder %s82, %s98
      %p100 = scmp.eq.s32.totalorder %s18, 0
      %p101 = por %p99, %p100
      %s102 = ssub.s32 %s19, %s31
      %s103 = ssub.s32 %s20, %s27
      %s104 = sor.u32 %s102, %s103
      %p105 = scmp.eq.s32.totalorder %s104, 0
      %s107 = sadd.s32 %s106, 1
      %s108 = scalar_select %p105, %s106, %s107
      %p111 = pneg %p105
      %p112 = scmp.eq.s32.totalorder %s12, 1
      %p113 = por %p111, %p112
      %p114 = scmp.ne.s32.totalorder %s106, %s109
      %p115 = scmp.eq.s32.totalorder %s12, 0
      %p116 = por %p114, %p115
      %p117 = scmp.ne.s32.totalorder %s106, %s109
      %p118 = scmp.eq.s32.totalorder %s17, 1
      %p119 = por %p117, %p118
      %p120 = scmp.ne.s32.totalorder %s109, %s110
      %p121 = scmp.eq.s32.totalorder %s17, 0
      %p122 = por %p120, %p121
      %p123 = scmp.ne.s32.totalorder %s109, %s110
      %p124 = scmp.eq.s32.totalorder %s18, 1
      %p125 = por %p123, %p124
      %p127 = scmp.ne.s32.totalorder %s110, %s126
      %p128 = scmp.eq.s32.totalorder %s18, 0
      %p129 = por %p127, %p128
      %p130 = scmp.le.s32.totalorder 1, %s12
      %p131 = scmp.lt.s32.totalorder %s12, 3
      %p132 = pnand %p130, %p131
      %p133 = pneg %p132
      // Predicated region
      $region9: #{tpu_custom_call.1} parent=5 // pred_check
        _
      $region10: #{tpu_custom_call.1} parent=5 // pred_check_branch
        %135 = sbr.rel (%p132) target = $region12
      $region11: #{tpu_custom_call.1} parent=5 // pred_region
        %s136 = ssub.s32 %s12, 1
        // Predicated region
        $region13: #{tpu_custom_call.1} parent=11 // pred_check
          %p137 = pneg %p45
        $region14: #{tpu_custom_call.1} parent=11 // pred_check_branch
          %139 = sbr.rel (%p137) target = $region16
        $region15: #{tpu_custom_call.1} parent=11 // pred_region
          _
        $region16: #{tpu_custom_call.1} parent=11 // pred_fallthru
          _
        // Predicated region
        $region17: #{tpu_custom_call.1} parent=11 // pred_check
          %p140 = pneg %p66
        $region18: #{tpu_custom_call.1} parent=11 // pred_check_branch
          %142 = sbr.rel (%p140) target = $region20
        $region19: #{tpu_custom_call.1} parent=11 // pred_region
          _
        $region20: #{tpu_custom_call.1} parent=11 // pred_fallthru
          _
      $region12: #{tpu_custom_call.1} parent=5 // pred_fallthru
        _
      %p143 = scmp.lt.s32.totalorder %s12, 2
      // Predicated region
      $region21: #{tpu_custom_call.1} parent=5 // pred_check
        %p144 = pneg %p143
      $region22: #{tpu_custom_call.1} parent=5 // pred_check_branch
        %146 = sbr.rel (%p144) target = $region24
      $region23: #{tpu_custom_call.1} parent=5 // pred_region
        // Predicated region
        $region25: #{tpu_custom_call.1} parent=23 // pred_check
          %p147 = pneg %p88
        $region26: #{tpu_custom_call.1} parent=23 // pred_check_branch
          %149 = sbr.rel (%p147) target = $region28
        $region27: #{tpu_custom_call.1} parent=23 // pred_region
          %s150 = smul.u32 2, %s20
          %p151 = scmp.lt.s32.totalorder %s19, 1
          %s152 = scalar_select %p151, %s19, 1
          %p153 = scmp.lt.s32.totalorder %s150, 1
          %s154 = scalar_select %p153, %s150, 1
          %s155 = smul.addr %s152, 2
          %s156 = sadd.s32 %s154, %s155
          %s157 = smul.addr %s156, 4
          %s158 = scalar_lea.vmem %s2, %s157
          %s159 = smul.u32 2, %s20
        $region28: #{tpu_custom_call.1} parent=23 // pred_fallthru
          _
      $region24: #{tpu_custom_call.1} parent=5 // pred_fallthru
        _
      %p160 = scmp.le.s32.totalorder 1, %s12
      %p161 = scmp.lt.s32.totalorder %s12, 3
      %p162 = pnand %p160, %p161
      %p163 = pneg %p162
      // Predicated region
      $region29: #{tpu_custom_call.1} parent=5 // pred_check
        _
      $region30: #{tpu_custom_call.1} parent=5 // pred_check_branch
        %165 = sbr.rel (%p162) target = $region32
      $region31: #{tpu_custom_call.1} parent=5 // pred_region
        %s166 = ssub.s32 %s12, 1
        %p167 = pneg %p45
        %p168 = pneg %p42
        %p169 = pneg %p66
        %p170 = pneg %p63
        %s171 = smul.u32 2, %s22
        %p172 = scmp.lt.s32.totalorder %s21, 1
        %s173 = scalar_select %p172, %s21, 1
        %p174 = scmp.lt.s32.totalorder %s171, 1
        %s175 = scalar_select %p174, %s171, 1
        %s176 = smul.addr %s173, 2
        %s177 = sadd.s32 %s175, %s176
        %s178 = smul.addr %s177, 4
        %s179 = scalar_lea.vmem %s2, %s178
        %p180 = pneg %p94
        %p181 = pneg %p91
        %p182 = pneg %p122
        %p183 = pneg %p119
        %s184 = sand.u32 %s109, 1
        %s185 = scalar_lea.sflag [#allocation3], %s184
        %s186 = sand.u32 %s109, 1
        %s187 = smul.addr %s186, 16
        %s188 = scalar_lea.vmem [#allocation2], %s187
        %s189 = smul.u32 2, %s22
        %p190 = scmp.lt.s32.totalorder %s21, 1
        %s191 = scalar_select %p190, %s21, 1
        %p192 = scmp.lt.s32.totalorder %s189, 1
        %s193 = scalar_select %p192, %s189, 1
        %s194 = smul.addr %s191, 2
        %s195 = sadd.s32 %s193, %s194
        %s196 = smul.addr %s195, 4
        %s197 = scalar_lea.vmem %s2, %s196
        %s198 = smul.u32 2, %s22
        %s199 = smul.u32 2, %s22
        %v200 = vld [vmem:[%s0] sm:$0xff]
        %v201 = vld [vmem:[%s197] sm:$0xff]
        %v202 = vld [vmem:[%s1] sm:$0xff]
        %204 = vset.pattern.permute.xlu0 0
        %205 = vperm.xlu0 %204, %v202
        %v206 = vpop.permute.xlu0 %205
        %v209 = vcombine.high %v201, %v201
        %vm210 = vcmask 31744
        %v212 = vsel %vm210, %v200, 0
        %vm214 = vcmask 1043456
        %v215 = vsel %vm214, %v201, 0
        %v217 = vsel %vm214, %v209, 0
        %219 = vmatprep.subr.mxu0 0.0
        %220 = vmatpush1.msra.mxu0 0.0
        %221 = vmatprep.subr.mxu0 0.0
        %222 = vmatpush1.msra.mxu0 0.0
        %223 = vmatprep.subr.mxu0 0.0
        %224 = vmatpush1.msra.mxu0 0.0
        %225 = vmatprep.subr.mxu0 0.0
        %226 = vmatpush1.msra.mxu0 0.0
        %227 = vmatprep.subr.mxu0 0.0
        %228 = vmatpush1.msra.mxu0 0.0
        %229 = vmatprep.subr.mxu0 0.0
        %230 = vmatpush1.msra.mxu0 0.0
        %231 = vmatprep.subr.mxu0 0.0
        %232 = vmatpush1.msra.mxu0 0.0
        %233 = vmatprep.subr.mxu0 0.0
        %234 = vmatpush1.msra.mxu0 0.0
        %235 = vmatprep.subr.mxu0 0.0
        %236 = vmatpush1.msra.mxu0 0.0
        %237 = vmatprep.subr.mxu0 0.0
        %238 = vmatpush1.msra.mxu0 0.0
        %239 = vmatprep.subr.mxu0 0.0
        %240 = vmatpush1.msra.mxu0 0.0
        %241 = vmatprep.subr.mxu0 0.0
        %242 = vmatpush1.msra.mxu0 0.0
        %243 = vmatprep.subr.mxu0 0.0
        %244 = vmatpush1.msra.mxu0 0.0
        %245 = vmatprep.subr.mxu0 0.0
        %246 = vmatpush1.msra.mxu0 0.0
        %247 = vmatprep.subr.mxu0 0.0
        %248 = vmatpush1.msra.mxu0 0.0
        %249 = vmatprep.subr.mxu0 %v217
        %250 = vmatpush1.msra.mxu0 %v215
        %251 = vmatprep.subr.mxu0 0.0
        %252 = vmatpush2.msra.mxu0 0.0
        %253 = vmatprep.subr.mxu0 0.0
        %254 = vmatpush2.msra.mxu0 0.0
        %255 = vmatprep.subr.mxu0 0.0
        %256 = vmatpush2.msra.mxu0 0.0
        %257 = vmatprep.subr.mxu0 0.0
        %258 = vmatpush2.msra.mxu0 0.0
        %259 = vmatprep.subr.mxu0 0.0
        %260 = vmatpush2.msra.mxu0 0.0
        %261 = vmatprep.subr.mxu0 0.0
        %262 = vmatpush2.msra.mxu0 0.0
        %263 = vmatprep.subr.mxu0 0.0
        %264 = vmatpush2.msra.mxu0 0.0
        %265 = vmatprep.subr.mxu0 0.0
        %266 = vmatpush2.msra.mxu0 0.0
        %267 = vmatprep.subr.mxu0 0.0
        %268 = vmatpush2.msra.mxu0 0.0
        %269 = vmatprep.subr.mxu0 0.0
        %270 = vmatpush2.msra.mxu0 0.0
        %271 = vmatprep.subr.mxu0 0.0
        %272 = vmatpush2.msra.mxu0 0.0
        %273 = vmatprep.subr.mxu0 0.0
        %274 = vmatpush2.msra.mxu0 0.0
        %275 = vmatprep.subr.mxu0 0.0
        %276 = vmatpush2.msra.mxu0 0.0
        %277 = vmatprep.subr.mxu0 0.0
        %278 = vmatpush2.msra.mxu0 0.0
        %279 = vmatprep.subr.mxu0 0.0
        %280 = vmatpush2.msra.mxu0 0.0
        %281 = vmatprep.subr.mxu0 0.0
        %282 = vmatpush2.msra.mxu0 0.0
        %283 = vmatprep.mubr.f32.mxu0 0.0
        %284 = vmatmul.mubr.f32.gmra.mxu0 %v212
        %v285 = vpop.f32.mrf.mxu0
        %v286 = vadd.f32 %v206, %v285
        %v287 = vpop.f32.mrf.mxu0
        %v288 = vadd.f32 %v206, %v287
        %289 = vdwg.mxu0
        %v290 = vmax.f32 %v286, 0.0
        %v291 = vmax.f32 %v288, 0.0
        %292 = vst [vmem:[%s188] sm:$0xff] %v290
        %293 = vst [vmem:[%s188 + $0x8] sm:$0xff] %v291
        %s294 = sand.u32 %s109, 1
        %s295 = scalar_lea.sflag [#allocation3], %s294
        %s296 = sand.u32 %s109, 1
        %s297 = smul.addr %s296, 16
        %s298 = scalar_lea.vmem [#allocation2], %s297
        // Predicated region
        $region33: #{tpu_custom_call.1} parent=31 // pred_check
          %p299 = pneg %p119
        $region34: #{tpu_custom_call.1} parent=31 // pred_check_branch
          %301 = sbr.rel (%p299) target = $region36
        $region35: #{tpu_custom_call.1} parent=31 // pred_region
          %s302 = smul.u32 2, %s22
          %s304 = ssub.s32 256, 256
          %305 = vsyncadd %s295, %s304
          %s306 = smul.addr %s21, 2
          %s307 = sadd.s32 %s302, %s306
          %s308 = smul.addr %s307, 128
          %s309 = scalar_lea.hbm %s3, %s308
          %s311 = sshll.u32 %s298, 4
          %s312 = int_to_ptr.vmem [resolvable:$true] %s311
          %314 = dma.vmem_to_hbm [thread:$0]  %s312, 256, %s309, %s295
        $region36: #{tpu_custom_call.1} parent=31 // pred_fallthru
          _
      $region32: #{tpu_custom_call.1} parent=5 // pred_fallthru
        _
      %p315 = scmp.le.s32.totalorder 2, %s12
      // Predicated region
      $region37: #{tpu_custom_call.1} parent=5 // pred_check
        %p316 = pneg %p315
      $region38: #{tpu_custom_call.1} parent=5 // pred_check_branch
        %318 = sbr.rel (%p316) target = $region40
      $region39: #{tpu_custom_call.1} parent=5 // pred_region
        %s319 = ssub.s32 %s12, 2
        // Predicated region
        $region41: #{tpu_custom_call.1} parent=39 // pred_check
          %p320 = pneg %p125
        $region42: #{tpu_custom_call.1} parent=39 // pred_check_branch
          %322 = sbr.rel (%p320) target = $region44
        $region43: #{tpu_custom_call.1} parent=39 // pred_region
          %s323 = sand.u32 %s110, 1
          %s324 = scalar_lea.sflag [#allocation3], %s323
          %s325 = sand.u32 %s110, 1
          %s326 = smul.addr %s325, 16
          %s327 = scalar_lea.vmem [#allocation2], %s326
          %328 = dma.done %s324, 256
        $region44: #{tpu_custom_call.1} parent=39 // pred_fallthru
          _
      $region40: #{tpu_custom_call.1} parent=5 // pred_fallthru
        _
    $region6: #{tpu_custom_call.1} parent=1 // loop_footer
      %s16 = sadd.s32 1, %s12
    $region7: #{tpu_custom_call.1} parent=1 // loop_footer_branch
      %11 = sbr.rel target = $region3
    $region8: #{tpu_custom_call.1} parent=1 // loop_exit
      _
    %329 = vsyncpa [#allocation3], 1
    %s330 = scalar_lea.sflag [#allocation3], 1
    %331 = vsyncpa %s330, 1

</llo_original>
